<compile_context>
chip_gen: v5e
topology: v5e:2x2
jax: 0.10.0
libtpu: 0.0.40
codegen_flags: <defaults>
</compile_context>

<pallas_src>
import functools

import jax
import jax.numpy as jnp
from jax.experimental import pallas as pl
from jax.experimental.pallas import tpu as pltpu


# ---------------- small, config-consistent sizes --------------------------
BATCH = 2
SEQ = 8
D_MODEL = 32
N_HEADS = 4
D_HEAD = D_MODEL // N_HEADS          # key_value_proj_dim = d_model // num_heads
INNER = N_HEADS * D_HEAD             # == d_model here
LN_EPS = 1e-6


# ---------------- Pallas kernel --------------------------------------------
def t5_self_attn_kernel(*refs, batch, seq, d_model, n_heads, d_head, eps,
                        has_bias):
    # refs (no bias):   hs (B*S, D), ln_w (1, D), wqkv (D, 3*inner) bf16,
    #                   wo_t (inner, D) bf16, out (B*S, D)
    # refs (with bias): hs, bias (1, H, S, S), ln_w, wqkv, wo_t, out
    if has_bias:
        hs_ref, bias_ref, lnw_ref, wqkv_ref, wot_ref, out_ref = refs
    else:
        hs_ref, lnw_ref, wqkv_ref, wot_ref, out_ref = refs
        bias_ref = None

    inner = n_heads * d_head
    x = hs_ref[...].astype(jnp.float32)                        # (B*S, D)

    # --- hoisted single loads (no repeated vld inside the unrolled loops) ---
    ln_w = lnw_ref[...]                                        # (1, D)   f32
    wqkv = wqkv_ref[...]                                       # (D, 3i)  bf16
    wo_t = wot_ref[...]                                        # (i, D)   bf16
    bias_all = bias_ref[...].astype(jnp.float32) if has_bias else None

    # --- T5LayerNorm (RMS norm, fp32 math) ---
    variance = jnp.mean(x * x, axis=-1, keepdims=True)         # (B*S, 1)
    normed = (x * jax.lax.rsqrt(variance + eps)) * ln_w        # (B*S, D)

    # --- fused Q/K/V projection: one MXU pass, bf16 operands, f32 acc ---
    qkv = jnp.dot(normed.astype(jnp.bfloat16), wqkv,
                  preferred_element_type=jnp.float32)          # (B*S, 3*inner)

    # --- per (batch, head) attention; T5: no 1/sqrt(d) scaling ---
    ctx_batches = []
    for b in range(batch):
        r0 = b * seq
        ctx_heads = []
        for h in range(n_heads):
            c0 = h * d_head
            qh = qkv[r0:r0 + seq, c0:c0 + d_head].astype(jnp.bfloat16)
            kh = qkv[r0:r0 + seq,
                     inner + c0:inner + c0 + d_head].astype(jnp.bfloat16)
            vh = qkv[r0:r0 + seq,
                     2 * inner + c0:2 * inner + c0 + d_head].astype(jnp.bfloat16)

            # q @ k^T without materializing a transpose (contract dim 1 of both)
            scores = jax.lax.dot_general(
                qh, kh, (((1,), (1,)), ((), ())),
                preferred_element_type=jnp.float32)            # (S, S) f32
            if has_bias:
                scores = scores + bias_all[0, h]

            # softmax in f32; approx reciprocal goes to the EUP slot
            m = jnp.max(scores, axis=-1, keepdims=True)
            p = jnp.exp(scores - m)
            p = p * pl.reciprocal(jnp.sum(p, axis=-1, keepdims=True),
                                  approx=True)

            ctx_h = jnp.dot(p.astype(jnp.bfloat16), vh,
                            preferred_element_type=jnp.float32)  # (S, dh) f32
            ctx_heads.append(ctx_h.astype(jnp.bfloat16))

        # re-pack heads along the lane axis (cheap in-vreg selects at INNER=32)
        ctx_batches.append(jnp.concatenate(ctx_heads, axis=-1))   # (S, inner)

    ctx = jnp.concatenate(ctx_batches, axis=0)                    # (B*S, inner) bf16

    # --- single output-projection matmul (1 MXU pass instead of B*H) ---
    attn = jnp.dot(ctx, wo_t, preferred_element_type=jnp.float32)  # (B*S, D)

    # residual add (dropout = identity in eval mode); one whole-tile store
    out_ref[...] = (x + attn).astype(out_ref.dtype)


# ---------------- wrapper ---------------------------------------------------
def t5_layer_self_attention(hidden_states, kparams, position_bias=None):
    """hidden_states: (B, S, D) float32. kparams from prepare_params().
    Returns (out, position_bias) — same contract as the PyTorch module."""
    B, S, D = hidden_states.shape
    H, dh = N_HEADS, D_HEAD
    has_bias = position_bias is not None

    hs2 = hidden_states.reshape(B * S, D)   # fold batch into sublane axis (free)

    args = [hs2]
    if has_bias:
        args.append(position_bias)
    args += [kparams["ln_w"], kparams["wqkv"], kparams["wo_t"]]

    kernel = functools.partial(
        t5_self_attn_kernel,
        batch=B, seq=S, d_model=D, n_heads=H, d_head=dh, eps=LN_EPS,
        has_bias=has_bias)

    # Single invocation (no grid): whole arrays resident in VMEM, no
    # per-step overhead, no double-buffering of the invariant weights.
    out2 = pl.pallas_call(
        kernel,
        out_shape=jax.ShapeDtypeStruct((B * S, D), hidden_states.dtype),
        in_specs=[pl.BlockSpec(memory_space=pltpu.MemorySpace.VMEM)] * len(args),
        out_specs=pl.BlockSpec(memory_space=pltpu.MemorySpace.VMEM),
    )(*args)

    out = out2.reshape(B, S, D)

    if position_bias is None:
        # has_relative_attention_bias=False, attention_mask=None -> zeros
        # (returned, but never fed through the kernel).
        position_bias = jnp.zeros((1, H, S, S), dtype=hidden_states.dtype)

    return out, position_bias


# ---------------- deterministic param init + one-time layout prep ----------
def init_params(key):
    k1, k2, k3, k4 = jax.random.split(key, 4)
    scale = 0.05
    return {
        # nn.Linear(d_model, inner_dim, bias=False).weight has shape (inner, d_model)
        "wq": scale * jax.random.normal(k1, (INNER, D_MODEL), jnp.float32),
        "wk": scale * jax.random.normal(k2, (INNER, D_MODEL), jnp.float32),
        "wv": scale * jax.random.normal(k3, (INNER, D_MODEL), jnp.float32),
        "wo": scale * jax.random.normal(k4, (D_MODEL, INNER), jnp.float32),
        "ln_w": jnp.ones((D_MODEL,), jnp.float32),   # T5LayerNorm init = ones
    }


def prepare_params(raw):
    """One-time layout prep (hoisted out of the per-call path).
    Weights stored as bf16 MXU operands; f32 accumulation happens in-kernel."""
    wqkv = jnp.concatenate([raw["wq"].T, raw["wk"].T, raw["wv"].T],
                           axis=1).astype(jnp.bfloat16)          # (D, 3*INNER)
    wo_t = raw["wo"].T.astype(jnp.bfloat16)                      # (INNER, D)
    ln_w = raw["ln_w"].reshape(1, D_MODEL)                       # (1, D) f32
    return {"wqkv": wqkv, "wo_t": wo_t, "ln_w": ln_w}


if __name__ == "__main__":
    key = jax.random.PRNGKey(0)
    pkey, xkey = jax.random.split(key)
    raw_params = init_params(pkey)
    kparams = jax.tree_util.tree_map(jax.block_until_ready, prepare_params(raw_params))
    hidden_states = jax.random.normal(xkey, (BATCH, SEQ, D_MODEL), jnp.float32)

    # Path 1: position_bias=None (bias never touches the kernel).
    out, pos_bias = t5_layer_self_attention(hidden_states, kparams)
    out = jax.block_until_ready(out)
    pos_bias = jax.block_until_ready(pos_bias)

    assert out.shape == (BATCH, SEQ, D_MODEL)
    assert pos_bias.shape == (1, N_HEADS, SEQ, SEQ)

    # Path 2: reuse the returned position_bias (as later T5 layers do);
    # bias is zero, so the result must match path 1.
    out2, _ = t5_layer_self_attention(hidden_states, kparams, position_bias=pos_bias)
    out2 = jax.block_until_ready(out2)
    assert jnp.allclose(out, out2, rtol=1e-5, atol=1e-5)

    print("KERNEL_OK")
</pallas_src>

<mosaic_0001>
module attributes {stable_mosaic.version = 11 : i64} {
  func.func @t5_self_attn_kernel(%arg0: memref<16x32xf32, #tpu.memory_space<vmem>>, %arg1: memref<1x32xf32, #tpu.memory_space<vmem>>, %arg2: memref<32x96xbf16, #tpu.memory_space<vmem>>, %arg3: memref<32x32xbf16, #tpu.memory_space<vmem>>, %arg4: memref<16x32xf32, #tpu.memory_space<vmem>>) attributes {dimension_semantics = [], scalar_prefetch = 0 : i64, scratch_operands = 0 : i64, tpu.core_type = #tpu.core_type<tc>} {
    %c0 = arith.constant 0 : index
    %c0_0 = arith.constant 0 : index
    %0 = vector.load %arg0[%c0, %c0_0] : memref<16x32xf32, #tpu.memory_space<vmem>>, vector<16x32xf32>
    %c0_1 = arith.constant 0 : index
    %c0_2 = arith.constant 0 : index
    %1 = vector.load %arg1[%c0_1, %c0_2] : memref<1x32xf32, #tpu.memory_space<vmem>>, vector<1x32xf32>
    %c0_3 = arith.constant 0 : index
    %c0_4 = arith.constant 0 : index
    %2 = vector.load %arg2[%c0_3, %c0_4] : memref<32x96xbf16, #tpu.memory_space<vmem>>, vector<32x96xbf16>
    %c0_5 = arith.constant 0 : index
    %c0_6 = arith.constant 0 : index
    %3 = vector.load %arg3[%c0_5, %c0_6] : memref<32x32xbf16, #tpu.memory_space<vmem>>, vector<32x32xbf16>
    %4 = arith.mulf %0, %0 : vector<16x32xf32>
    %cst = arith.constant dense<0.000000e+00> : vector<16xf32>
    %5 = vector.multi_reduction <add>, %4, %cst [1] : vector<16x32xf32> to vector<16xf32>
    %6 = vector.shape_cast %5 : vector<16xf32> to vector<16x1xf32>
    %cst_7 = arith.constant 3.200000e+01 : f32
    %7 = vector.broadcast %cst_7 : f32 to vector<16x1xf32>
    %8 = arith.divf %6, %7 : vector<16x1xf32>
    %cst_8 = arith.constant 9.99999997E-7 : f32
    %9 = vector.broadcast %cst_8 : f32 to vector<16x1xf32>
    %10 = arith.addf %8, %9 : vector<16x1xf32>
    %11 = math.rsqrt %10 : vector<16x1xf32>
    %12 = vector.broadcast %11 : vector<16x1xf32> to vector<16x32xf32>
    %13 = arith.mulf %0, %12 : vector<16x32xf32>
    %14 = vector.broadcast %1 : vector<1x32xf32> to vector<16x32xf32>
    %15 = arith.mulf %13, %14 : vector<16x32xf32>
    %16 = arith.truncf %15 : vector<16x32xf32> to vector<16x32xbf16>
    %cst_9 = arith.constant dense<0.000000e+00> : vector<16x96xf32>
    %17 = tpu.matmul %16, %2, %cst_9 {dimension_numbers = #tpu.dot_dimension_numbers<[1], [0], [0], [1], [0, 0, 1, 1], [], []>} : vector<16x32xbf16>, vector<32x96xbf16>, vector<16x96xf32> -> vector<16x96xf32>
    %18 = vector.extract_strided_slice %17 {offsets = [0, 0], sizes = [8, 8], strides = [1, 1]} : vector<16x96xf32> to vector<8x8xf32>
    %19 = arith.truncf %18 : vector<8x8xf32> to vector<8x8xbf16>
    %20 = vector.extract_strided_slice %17 {offsets = [0, 32], sizes = [8, 8], strides = [1, 1]} : vector<16x96xf32> to vector<8x8xf32>
    %21 = arith.truncf %20 : vector<8x8xf32> to vector<8x8xbf16>
    %22 = vector.extract_strided_slice %17 {offsets = [0, 64], sizes = [8, 8], strides = [1, 1]} : vector<16x96xf32> to vector<8x8xf32>
    %23 = arith.truncf %22 : vector<8x8xf32> to vector<8x8xbf16>
    %cst_10 = arith.constant dense<0.000000e+00> : vector<8x8xf32>
    %24 = tpu.matmul %19, %21, %cst_10 {dimension_numbers = #tpu.dot_dimension_numbers<[1], [1], [0], [0], [0, 0, 1, 0], [], []>} : vector<8x8xbf16>, vector<8x8xbf16>, vector<8x8xf32> -> vector<8x8xf32>
    %cst_11 = arith.constant dense<0xFF800000> : vector<8xf32>
    %25 = vector.multi_reduction <maximumf>, %24, %cst_11 [1] : vector<8x8xf32> to vector<8xf32>
    %26 = vector.shape_cast %25 : vector<8xf32> to vector<8x1xf32>
    %27 = vector.broadcast %26 : vector<8x1xf32> to vector<8x8xf32>
    %28 = arith.subf %24, %27 : vector<8x8xf32>
    %29 = math.exp %28 : vector<8x8xf32>
    %cst_12 = arith.constant dense<0.000000e+00> : vector<8xf32>
    %30 = vector.multi_reduction <add>, %29, %cst_12 [1] : vector<8x8xf32> to vector<8xf32>
    %31 = vector.shape_cast %30 : vector<8xf32> to vector<8x1xf32>
    %32 = tpu.reciprocal %31 {approx = true} : vector<8x1xf32> -> vector<8x1xf32>
    %33 = vector.broadcast %32 : vector<8x1xf32> to vector<8x8xf32>
    %34 = arith.mulf %29, %33 : vector<8x8xf32>
    %35 = arith.truncf %34 : vector<8x8xf32> to vector<8x8xbf16>
    %cst_13 = arith.constant dense<0.000000e+00> : vector<8x8xf32>
    %36 = tpu.matmul %35, %23, %cst_13 {dimension_numbers = #tpu.dot_dimension_numbers<[1], [0], [0], [1], [0, 0, 1, 1], [], []>} : vector<8x8xbf16>, vector<8x8xbf16>, vector<8x8xf32> -> vector<8x8xf32>
    %37 = arith.truncf %36 : vector<8x8xf32> to vector<8x8xbf16>
    %38 = vector.extract_strided_slice %17 {offsets = [0, 8], sizes = [8, 8], strides = [1, 1]} : vector<16x96xf32> to vector<8x8xf32>
    %39 = arith.truncf %38 : vector<8x8xf32> to vector<8x8xbf16>
    %40 = vector.extract_strided_slice %17 {offsets = [0, 40], sizes = [8, 8], strides = [1, 1]} : vector<16x96xf32> to vector<8x8xf32>
    %41 = arith.truncf %40 : vector<8x8xf32> to vector<8x8xbf16>
    %42 = vector.extract_strided_slice %17 {offsets = [0, 72], sizes = [8, 8], strides = [1, 1]} : vector<16x96xf32> to vector<8x8xf32>
    %43 = arith.truncf %42 : vector<8x8xf32> to vector<8x8xbf16>
    %cst_14 = arith.constant dense<0.000000e+00> : vector<8x8xf32>
    %44 = tpu.matmul %39, %41, %cst_14 {dimension_numbers = #tpu.dot_dimension_numbers<[1], [1], [0], [0], [0, 0, 1, 0], [], []>} : vector<8x8xbf16>, vector<8x8xbf16>, vector<8x8xf32> -> vector<8x8xf32>
    %cst_15 = arith.constant dense<0xFF800000> : vector<8xf32>
    %45 = vector.multi_reduction <maximumf>, %44, %cst_15 [1] : vector<8x8xf32> to vector<8xf32>
    %46 = vector.shape_cast %45 : vector<8xf32> to vector<8x1xf32>
    %47 = vector.broadcast %46 : vector<8x1xf32> to vector<8x8xf32>
    %48 = arith.subf %44, %47 : vector<8x8xf32>
    %49 = math.exp %48 : vector<8x8xf32>
    %cst_16 = arith.constant dense<0.000000e+00> : vector<8xf32>
    %50 = vector.multi_reduction <add>, %49, %cst_16 [1] : vector<8x8xf32> to vector<8xf32>
    %51 = vector.shape_cast %50 : vector<8xf32> to vector<8x1xf32>
    %52 = tpu.reciprocal %51 {approx = true} : vector<8x1xf32> -> vector<8x1xf32>
    %53 = vector.broadcast %52 : vector<8x1xf32> to vector<8x8xf32>
    %54 = arith.mulf %49, %53 : vector<8x8xf32>
    %55 = arith.truncf %54 : vector<8x8xf32> to vector<8x8xbf16>
    %cst_17 = arith.constant dense<0.000000e+00> : vector<8x8xf32>
    %56 = tpu.matmul %55, %43, %cst_17 {dimension_numbers = #tpu.dot_dimension_numbers<[1], [0], [0], [1], [0, 0, 1, 1], [], []>} : vector<8x8xbf16>, vector<8x8xbf16>, vector<8x8xf32> -> vector<8x8xf32>
    %57 = arith.truncf %56 : vector<8x8xf32> to vector<8x8xbf16>
    %58 = vector.extract_strided_slice %17 {offsets = [0, 16], sizes = [8, 8], strides = [1, 1]} : vector<16x96xf32> to vector<8x8xf32>
    %59 = arith.truncf %58 : vector<8x8xf32> to vector<8x8xbf16>
    %60 = vector.extract_strided_slice %17 {offsets = [0, 48], sizes = [8, 8], strides = [1, 1]} : vector<16x96xf32> to vector<8x8xf32>
    %61 = arith.truncf %60 : vector<8x8xf32> to vector<8x8xbf16>
    %62 = vector.extract_strided_slice %17 {offsets = [0, 80], sizes = [8, 8], strides = [1, 1]} : vector<16x96xf32> to vector<8x8xf32>
    %63 = arith.truncf %62 : vector<8x8xf32> to vector<8x8xbf16>
    %cst_18 = arith.constant dense<0.000000e+00> : vector<8x8xf32>
    %64 = tpu.matmul %59, %61, %cst_18 {dimension_numbers = #tpu.dot_dimension_numbers<[1], [1], [0], [0], [0, 0, 1, 0], [], []>} : vector<8x8xbf16>, vector<8x8xbf16>, vector<8x8xf32> -> vector<8x8xf32>
    %cst_19 = arith.constant dense<0xFF800000> : vector<8xf32>
    %65 = vector.multi_reduction <maximumf>, %64, %cst_19 [1] : vector<8x8xf32> to vector<8xf32>
    %66 = vector.shape_cast %65 : vector<8xf32> to vector<8x1xf32>
    %67 = vector.broadcast %66 : vector<8x1xf32> to vector<8x8xf32>
    %68 = arith.subf %64, %67 : vector<8x8xf32>
    %69 = math.exp %68 : vector<8x8xf32>
    %cst_20 = arith.constant dense<0.000000e+00> : vector<8xf32>
    %70 = vector.multi_reduction <add>, %69, %cst_20 [1] : vector<8x8xf32> to vector<8xf32>
    %71 = vector.shape_cast %70 : vector<8xf32> to vector<8x1xf32>
    %72 = tpu.reciprocal %71 {approx = true} : vector<8x1xf32> -> vector<8x1xf32>
    %73 = vector.broadcast %72 : vector<8x1xf32> to vector<8x8xf32>
    %74 = arith.mulf %69, %73 : vector<8x8xf32>
    %75 = arith.truncf %74 : vector<8x8xf32> to vector<8x8xbf16>
    %cst_21 = arith.constant dense<0.000000e+00> : vector<8x8xf32>
    %76 = tpu.matmul %75, %63, %cst_21 {dimension_numbers = #tpu.dot_dimension_numbers<[1], [0], [0], [1], [0, 0, 1, 1], [], []>} : vector<8x8xbf16>, vector<8x8xbf16>, vector<8x8xf32> -> vector<8x8xf32>
    %77 = arith.truncf %76 : vector<8x8xf32> to vector<8x8xbf16>
    %78 = vector.extract_strided_slice %17 {offsets = [0, 24], sizes = [8, 8], strides = [1, 1]} : vector<16x96xf32> to vector<8x8xf32>
    %79 = arith.truncf %78 : vector<8x8xf32> to vector<8x8xbf16>
    %80 = vector.extract_strided_slice %17 {offsets = [0, 56], sizes = [8, 8], strides = [1, 1]} : vector<16x96xf32> to vector<8x8xf32>
    %81 = arith.truncf %80 : vector<8x8xf32> to vector<8x8xbf16>
    %82 = vector.extract_strided_slice %17 {offsets = [0, 88], sizes = [8, 8], strides = [1, 1]} : vector<16x96xf32> to vector<8x8xf32>
    %83 = arith.truncf %82 : vector<8x8xf32> to vector<8x8xbf16>
    %cst_22 = arith.constant dense<0.000000e+00> : vector<8x8xf32>
    %84 = tpu.matmul %79, %81, %cst_22 {dimension_numbers = #tpu.dot_dimension_numbers<[1], [1], [0], [0], [0, 0, 1, 0], [], []>} : vector<8x8xbf16>, vector<8x8xbf16>, vector<8x8xf32> -> vector<8x8xf32>
    %cst_23 = arith.constant dense<0xFF800000> : vector<8xf32>
    %85 = vector.multi_reduction <maximumf>, %84, %cst_23 [1] : vector<8x8xf32> to vector<8xf32>
    %86 = vector.shape_cast %85 : vector<8xf32> to vector<8x1xf32>
    %87 = vector.broadcast %86 : vector<8x1xf32> to vector<8x8xf32>
    %88 = arith.subf %84, %87 : vector<8x8xf32>
    %89 = math.exp %88 : vector<8x8xf32>
    %cst_24 = arith.constant dense<0.000000e+00> : vector<8xf32>
    %90 = vector.multi_reduction <add>, %89, %cst_24 [1] : vector<8x8xf32> to vector<8xf32>
    %91 = vector.shape_cast %90 : vector<8xf32> to vector<8x1xf32>
    %92 = tpu.reciprocal %91 {approx = true} : vector<8x1xf32> -> vector<8x1xf32>
    %93 = vector.broadcast %92 : vector<8x1xf32> to vector<8x8xf32>
    %94 = arith.mulf %89, %93 : vector<8x8xf32>
    %95 = arith.truncf %94 : vector<8x8xf32> to vector<8x8xbf16>
    %cst_25 = arith.constant dense<0.000000e+00> : vector<8x8xf32>
    %96 = tpu.matmul %95, %83, %cst_25 {dimension_numbers = #tpu.dot_dimension_numbers<[1], [0], [0], [1], [0, 0, 1, 1], [], []>} : vector<8x8xbf16>, vector<8x8xbf16>, vector<8x8xf32> -> vector<8x8xf32>
    %97 = arith.truncf %96 : vector<8x8xf32> to vector<8x8xbf16>
    %98 = tpu.concatenate %37, %57, %77, %97 in 1 : vector<8x8xbf16>, vector<8x8xbf16>, vector<8x8xbf16>, vector<8x8xbf16> -> vector<8x32xbf16>
    %99 = vector.extract_strided_slice %17 {offsets = [8, 0], sizes = [8, 8], strides = [1, 1]} : vector<16x96xf32> to vector<8x8xf32>
    %100 = arith.truncf %99 : vector<8x8xf32> to vector<8x8xbf16>
    %101 = vector.extract_strided_slice %17 {offsets = [8, 32], sizes = [8, 8], strides = [1, 1]} : vector<16x96xf32> to vector<8x8xf32>
    %102 = arith.truncf %101 : vector<8x8xf32> to vector<8x8xbf16>
    %103 = vector.extract_strided_slice %17 {offsets = [8, 64], sizes = [8, 8], strides = [1, 1]} : vector<16x96xf32> to vector<8x8xf32>
    %104 = arith.truncf %103 : vector<8x8xf32> to vector<8x8xbf16>
    %cst_26 = arith.constant dense<0.000000e+00> : vector<8x8xf32>
    %105 = tpu.matmul %100, %102, %cst_26 {dimension_numbers = #tpu.dot_dimension_numbers<[1], [1], [0], [0], [0, 0, 1, 0], [], []>} : vector<8x8xbf16>, vector<8x8xbf16>, vector<8x8xf32> -> vector<8x8xf32>
    %cst_27 = arith.constant dense<0xFF800000> : vector<8xf32>
    %106 = vector.multi_reduction <maximumf>, %105, %cst_27 [1] : vector<8x8xf32> to vector<8xf32>
    %107 = vector.shape_cast %106 : vector<8xf32> to vector<8x1xf32>
    %108 = vector.broadcast %107 : vector<8x1xf32> to vector<8x8xf32>
    %109 = arith.subf %105, %108 : vector<8x8xf32>
    %110 = math.exp %109 : vector<8x8xf32>
    %cst_28 = arith.constant dense<0.000000e+00> : vector<8xf32>
    %111 = vector.multi_reduction <add>, %110, %cst_28 [1] : vector<8x8xf32> to vector<8xf32>
    %112 = vector.shape_cast %111 : vector<8xf32> to vector<8x1xf32>
    %113 = tpu.reciprocal %112 {approx = true} : vector<8x1xf32> -> vector<8x1xf32>
    %114 = vector.broadcast %113 : vector<8x1xf32> to vector<8x8xf32>
    %115 = arith.mulf %110, %114 : vector<8x8xf32>
    %116 = arith.truncf %115 : vector<8x8xf32> to vector<8x8xbf16>
    %cst_29 = arith.constant dense<0.000000e+00> : vector<8x8xf32>
    %117 = tpu.matmul %116, %104, %cst_29 {dimension_numbers = #tpu.dot_dimension_numbers<[1], [0], [0], [1], [0, 0, 1, 1], [], []>} : vector<8x8xbf16>, vector<8x8xbf16>, vector<8x8xf32> -> vector<8x8xf32>
    %118 = arith.truncf %117 : vector<8x8xf32> to vector<8x8xbf16>
    %119 = vector.extract_strided_slice %17 {offsets = [8, 8], sizes = [8, 8], strides = [1, 1]} : vector<16x96xf32> to vector<8x8xf32>
    %120 = arith.truncf %119 : vector<8x8xf32> to vector<8x8xbf16>
    %121 = vector.extract_strided_slice %17 {offsets = [8, 40], sizes = [8, 8], strides = [1, 1]} : vector<16x96xf32> to vector<8x8xf32>
    %122 = arith.truncf %121 : vector<8x8xf32> to vector<8x8xbf16>
    %123 = vector.extract_strided_slice %17 {offsets = [8, 72], sizes = [8, 8], strides = [1, 1]} : vector<16x96xf32> to vector<8x8xf32>
    %124 = arith.truncf %123 : vector<8x8xf32> to vector<8x8xbf16>
    %cst_30 = arith.constant dense<0.000000e+00> : vector<8x8xf32>
    %125 = tpu.matmul %120, %122, %cst_30 {dimension_numbers = #tpu.dot_dimension_numbers<[1], [1], [0], [0], [0, 0, 1, 0], [], []>} : vector<8x8xbf16>, vector<8x8xbf16>, vector<8x8xf32> -> vector<8x8xf32>
    %cst_31 = arith.constant dense<0xFF800000> : vector<8xf32>
    %126 = vector.multi_reduction <maximumf>, %125, %cst_31 [1] : vector<8x8xf32> to vector<8xf32>
    %127 = vector.shape_cast %126 : vector<8xf32> to vector<8x1xf32>
    %128 = vector.broadcast %127 : vector<8x1xf32> to vector<8x8xf32>
    %129 = arith.subf %125, %128 : vector<8x8xf32>
    %130 = math.exp %129 : vector<8x8xf32>
    %cst_32 = arith.constant dense<0.000000e+00> : vector<8xf32>
    %131 = vector.multi_reduction <add>, %130, %cst_32 [1] : vector<8x8xf32> to vector<8xf32>
    %132 = vector.shape_cast %131 : vector<8xf32> to vector<8x1xf32>
    %133 = tpu.reciprocal %132 {approx = true} : vector<8x1xf32> -> vector<8x1xf32>
    %134 = vector.broadcast %133 : vector<8x1xf32> to vector<8x8xf32>
    %135 = arith.mulf %130, %134 : vector<8x8xf32>
    %136 = arith.truncf %135 : vector<8x8xf32> to vector<8x8xbf16>
    %cst_33 = arith.constant dense<0.000000e+00> : vector<8x8xf32>
    %137 = tpu.matmul %136, %124, %cst_33 {dimension_numbers = #tpu.dot_dimension_numbers<[1], [0], [0], [1], [0, 0, 1, 1], [], []>} : vector<8x8xbf16>, vector<8x8xbf16>, vector<8x8xf32> -> vector<8x8xf32>
    %138 = arith.truncf %137 : vector<8x8xf32> to vector<8x8xbf16>
    %139 = vector.extract_strided_slice %17 {offsets = [8, 16], sizes = [8, 8], strides = [1, 1]} : vector<16x96xf32> to vector<8x8xf32>
    %140 = arith.truncf %139 : vector<8x8xf32> to vector<8x8xbf16>
    %141 = vector.extract_strided_slice %17 {offsets = [8, 48], sizes = [8, 8], strides = [1, 1]} : vector<16x96xf32> to vector<8x8xf32>
    %142 = arith.truncf %141 : vector<8x8xf32> to vector<8x8xbf16>
    %143 = vector.extract_strided_slice %17 {offsets = [8, 80], sizes = [8, 8], strides = [1, 1]} : vector<16x96xf32> to vector<8x8xf32>
    %144 = arith.truncf %143 : vector<8x8xf32> to vector<8x8xbf16>
    %cst_34 = arith.constant dense<0.000000e+00> : vector<8x8xf32>
    %145 = tpu.matmul %140, %142, %cst_34 {dimension_numbers = #tpu.dot_dimension_numbers<[1], [1], [0], [0], [0, 0, 1, 0], [], []>} : vector<8x8xbf16>, vector<8x8xbf16>, vector<8x8xf32> -> vector<8x8xf32>
    %cst_35 = arith.constant dense<0xFF800000> : vector<8xf32>
    %146 = vector.multi_reduction <maximumf>, %145, %cst_35 [1] : vector<8x8xf32> to vector<8xf32>
    %147 = vector.shape_cast %146 : vector<8xf32> to vector<8x1xf32>
    %148 = vector.broadcast %147 : vector<8x1xf32> to vector<8x8xf32>
    %149 = arith.subf %145, %148 : vector<8x8xf32>
    %150 = math.exp %149 : vector<8x8xf32>
    %cst_36 = arith.constant dense<0.000000e+00> : vector<8xf32>
    %151 = vector.multi_reduction <add>, %150, %cst_36 [1] : vector<8x8xf32> to vector<8xf32>
    %152 = vector.shape_cast %151 : vector<8xf32> to vector<8x1xf32>
    %153 = tpu.reciprocal %152 {approx = true} : vector<8x1xf32> -> vector<8x1xf32>
    %154 = vector.broadcast %153 : vector<8x1xf32> to vector<8x8xf32>
    %155 = arith.mulf %150, %154 : vector<8x8xf32>
    %156 = arith.truncf %155 : vector<8x8xf32> to vector<8x8xbf16>
    %cst_37 = arith.constant dense<0.000000e+00> : vector<8x8xf32>
    %157 = tpu.matmul %156, %144, %cst_37 {dimension_numbers = #tpu.dot_dimension_numbers<[1], [0], [0], [1], [0, 0, 1, 1], [], []>} : vector<8x8xbf16>, vector<8x8xbf16>, vector<8x8xf32> -> vector<8x8xf32>
    %158 = arith.truncf %157 : vector<8x8xf32> to vector<8x8xbf16>
    %159 = vector.extract_strided_slice %17 {offsets = [8, 24], sizes = [8, 8], strides = [1, 1]} : vector<16x96xf32> to vector<8x8xf32>
    %160 = arith.truncf %159 : vector<8x8xf32> to vector<8x8xbf16>
    %161 = vector.extract_strided_slice %17 {offsets = [8, 56], sizes = [8, 8], strides = [1, 1]} : vector<16x96xf32> to vector<8x8xf32>
    %162 = arith.truncf %161 : vector<8x8xf32> to vector<8x8xbf16>
    %163 = vector.extract_strided_slice %17 {offsets = [8, 88], sizes = [8, 8], strides = [1, 1]} : vector<16x96xf32> to vector<8x8xf32>
    %164 = arith.truncf %163 : vector<8x8xf32> to vector<8x8xbf16>
    %cst_38 = arith.constant dense<0.000000e+00> : vector<8x8xf32>
    %165 = tpu.matmul %160, %162, %cst_38 {dimension_numbers = #tpu.dot_dimension_numbers<[1], [1], [0], [0], [0, 0, 1, 0], [], []>} : vector<8x8xbf16>, vector<8x8xbf16>, vector<8x8xf32> -> vector<8x8xf32>
    %cst_39 = arith.constant dense<0xFF800000> : vector<8xf32>
    %166 = vector.multi_reduction <maximumf>, %165, %cst_39 [1] : vector<8x8xf32> to vector<8xf32>
    %167 = vector.shape_cast %166 : vector<8xf32> to vector<8x1xf32>
    %168 = vector.broadcast %167 : vector<8x1xf32> to vector<8x8xf32>
    %169 = arith.subf %165, %168 : vector<8x8xf32>
    %170 = math.exp %169 : vector<8x8xf32>
    %cst_40 = arith.constant dense<0.000000e+00> : vector<8xf32>
    %171 = vector.multi_reduction <add>, %170, %cst_40 [1] : vector<8x8xf32> to vector<8xf32>
    %172 = vector.shape_cast %171 : vector<8xf32> to vector<8x1xf32>
    %173 = tpu.reciprocal %172 {approx = true} : vector<8x1xf32> -> vector<8x1xf32>
    %174 = vector.broadcast %173 : vector<8x1xf32> to vector<8x8xf32>
    %175 = arith.mulf %170, %174 : vector<8x8xf32>
    %176 = arith.truncf %175 : vector<8x8xf32> to vector<8x8xbf16>
    %cst_41 = arith.constant dense<0.000000e+00> : vector<8x8xf32>
    %177 = tpu.matmul %176, %164, %cst_41 {dimension_numbers = #tpu.dot_dimension_numbers<[1], [0], [0], [1], [0, 0, 1, 1], [], []>} : vector<8x8xbf16>, vector<8x8xbf16>, vector<8x8xf32> -> vector<8x8xf32>
    %178 = arith.truncf %177 : vector<8x8xf32> to vector<8x8xbf16>
    %179 = tpu.concatenate %118, %138, %158, %178 in 1 : vector<8x8xbf16>, vector<8x8xbf16>, vector<8x8xbf16>, vector<8x8xbf16> -> vector<8x32xbf16>
    %180 = tpu.concatenate %98, %179 in 0 : vector<8x32xbf16>, vector<8x32xbf16> -> vector<16x32xbf16>
    %cst_42 = arith.constant dense<0.000000e+00> : vector<16x32xf32>
    %181 = tpu.matmul %180, %3, %cst_42 {dimension_numbers = #tpu.dot_dimension_numbers<[1], [0], [0], [1], [0, 0, 1, 1], [], []>} : vector<16x32xbf16>, vector<32x32xbf16>, vector<16x32xf32> -> vector<16x32xf32>
    %182 = arith.addf %0, %181 : vector<16x32xf32>
    %c0_43 = arith.constant 0 : index
    %c0_44 = arith.constant 0 : index
    %183 = vector.load %arg4[%c0_43, %c0_44] : memref<16x32xf32, #tpu.memory_space<vmem>>, vector<16x32xf32>
    tpu.vector_store %arg4[%c0_43, %c0_44], %182 {strides = array<i32>} : memref<16x32xf32, #tpu.memory_space<vmem>>, vector<16x32xf32>,
    return
  }
}

</mosaic_0001>

<llo_original>
// kernel: tpu_custom_call.1
$region0: #{tpu_custom_call.1}
  #allocation0 [shape = 'u32[]', space=smem, size = 0x4, offset = 0x4, fixed_abs, tag = 'smem constant byte address 0x4 - core index']
  #allocation1 [shape = 'u32[72,128]{1,0:T(1,128)}', space=vmem, size = 0x9000, scoped, tag = 'internal scratch']
  %s0 = inlined_call_operand.hbm [shape: f32[16,32], index: 0, kind: input, shape index: {}]
  %s1 = inlined_call_operand.hbm [shape: f32[1,32], index: 1, kind: input, shape index: {}]
  %s2 = inlined_call_operand.hbm [shape: bf16[32,96], index: 2, kind: input, shape index: {}]
  %s3 = inlined_call_operand.hbm [shape: bf16[32,32], index: 3, kind: input, shape index: {}]
  %s4 = inlined_call_operand.hbm [shape: f32[16,32], index: 4, kind: output, shape index: {}]
  %s5 = sld [smem:[#allocation0]]
  $region42: #{tpu_custom_call.1} parent=0
    _
  %s7 = ssub.s32 1, %s5
  %s8 = scalar_select 0, %s7, %s5
  $region1: #{tpu_custom_call.1} parent=0
    #allocation2 [shape = 'u8[8192]{0}', space=vmem, size = 0x2000, scoped, tag = 'input window, operand 0, single buffered']
    #allocation3 [shape = 's32[1]{0}', space=sflag, size = 0x4, scoped, tag = 'scoped memory for tpu_custom_call.1']
    #allocation4 [shape = 's32[1]{0}', space=sflag, size = 0x4, scoped, tag = 'scoped memory for tpu_custom_call.1']
    #allocation5 [shape = 'u8[512]{0}', space=vmem, size = 0x400, scoped, tag = 'input window, operand 1, single buffered']
    #allocation6 [shape = 's32[1]{0}', space=sflag, size = 0x4, scoped, tag = 'scoped memory for tpu_custom_call.1']
    #allocation7 [shape = 'u8[8192]{0}', space=vmem, size = 0x2000, scoped, tag = 'input window, operand 2, single buffered']
    #allocation8 [shape = 'u8[8192]{0}', space=vmem, size = 0x2000, scoped, tag = 'input window, operand 3, single buffered']
    #allocation9 [shape = 's32[1]{0}', space=sflag, size = 0x4, scoped, tag = 'scoped memory for tpu_custom_call.1']
    #allocation10 [shape = 'u8[8192]{0}', space=vmem, size = 0x2000, scoped, tag = 'output window, operand 0, single buffered']
    %9 = vsyncpa [#allocation3], 0
    %10 = vsyncpa [#allocation6], 0
    %11 = vsyncpa [#allocation9], 0
    %12 = vsyncpa [#allocation4], 0
    // Predicated region
    $region2: #{tpu_custom_call.1} parent=1 // pred_check
      _
    $region3: #{tpu_custom_call.1} parent=1 // pred_check_branch
      %14 = sbr.rel (0) target = $region5
    $region4: #{tpu_custom_call.1} parent=1 // pred_region
      %16 = vsyncadd [#allocation3], 0
      %s17 = sshll.u32 %s0, 4
      %s18 = int_to_ptr.hbm [resolvable:$true] %s17
      %s19 = sshll.u32 [#allocation2], 4
      %s20 = int_to_ptr.vmem [resolvable:$true] %s19
      %25 = dma.hbm_to_vmem [thread:$0]  %s18, 256, %s20, [#allocation3], 128, 128, 8
    $region5: #{tpu_custom_call.1} parent=1 // pred_fallthru
      _
    // Predicated region
    $region6: #{tpu_custom_call.1} parent=1 // pred_check
      _
    $region7: #{tpu_custom_call.1} parent=1 // pred_check_branch
      %27 = sbr.rel (0) target = $region9
    $region8: #{tpu_custom_call.1} parent=1 // pred_region
      %29 = vsyncadd [#allocation6], 0
      %s31 = sshll.u32 %s1, 4
      %s32 = int_to_ptr.hbm [resolvable:$true] %s31
      %s33 = sshll.u32 [#allocation5], 4
      %s34 = int_to_ptr.vmem [resolvable:$true] %s33
      %36 = dma.hbm_to_vmem [thread:$0]  %s32, 16, %s34, [#allocation6]
    $region9: #{tpu_custom_call.1} parent=1 // pred_fallthru
      _
    // Predicated region
    $region10: #{tpu_custom_call.1} parent=1 // pred_check
      _
    $region11: #{tpu_custom_call.1} parent=1 // pred_check_branch
      %38 = sbr.rel (0) target = $region13
    $region12: #{tpu_custom_call.1} parent=1 // pred_region
      %40 = vsyncadd [#allocation6], 0
      %s41 = sshll.u32 %s2, 4
      %s42 = int_to_ptr.hbm [resolvable:$true] %s41
      %s43 = sshll.u32 [#allocation7], 4
      %s44 = int_to_ptr.vmem [resolvable:$true] %s43
      %49 = dma.hbm_to_vmem [thread:$0]  %s42, 256, %s44, [#allocation6], 64, 64, 4
    $region13: #{tpu_custom_call.1} parent=1 // pred_fallthru
      _
    // Predicated region
    $region14: #{tpu_custom_call.1} parent=1 // pred_check
      _
    $region15: #{tpu_custom_call.1} parent=1 // pred_check_branch
      %51 = sbr.rel (0) target = $region17
    $region16: #{tpu_custom_call.1} parent=1 // pred_region
      %53 = vsyncadd [#allocation9], 0
      %s54 = sshll.u32 %s3, 4
      %s55 = int_to_ptr.hbm [resolvable:$true] %s54
      %s56 = sshll.u32 [#allocation8], 4
      %s57 = int_to_ptr.vmem [resolvable:$true] %s56
      %62 = dma.hbm_to_vmem [thread:$0]  %s55, 256, %s57, [#allocation9], 64, 64, 4
    $region17: #{tpu_custom_call.1} parent=1 // pred_fallthru
      _
    // Predicated region
    $region18: #{tpu_custom_call.1} parent=1 // pred_check
      _
    $region19: #{tpu_custom_call.1} parent=1 // pred_check_branch
      %64 = sbr.rel (0) target = $region21
    $region20: #{tpu_custom_call.1} parent=1 // pred_region
      %66 = dma.done [#allocation3], 256
    $region21: #{tpu_custom_call.1} parent=1 // pred_fallthru
      _
    // Predicated region
    $region22: #{tpu_custom_call.1} parent=1 // pred_check
      _
    $region23: #{tpu_custom_call.1} parent=1 // pred_check_branch
      %68 = sbr.rel (0) target = $region25
    $region24: #{tpu_custom_call.1} parent=1 // pred_region
      %70 = dma.done [#allocation6], 16
    $region25: #{tpu_custom_call.1} parent=1 // pred_fallthru
      _
    // Predicated region
    $region26: #{tpu_custom_call.1} parent=1 // pred_check
      _
    $region27: #{tpu_custom_call.1} parent=1 // pred_check_branch
      %72 = sbr.rel (0) target = $region29
    $region28: #{tpu_custom_call.1} parent=1 // pred_region
      %74 = dma.done [#allocation6], 256
    $region29: #{tpu_custom_call.1} parent=1 // pred_fallthru
      _
    // Predicated region
    $region30: #{tpu_custom_call.1} parent=1 // pred_check
      _
    $region31: #{tpu_custom_call.1} parent=1 // pred_check_branch
      %76 = sbr.rel (0) target = $region33
    $region32: #{tpu_custom_call.1} parent=1 // pred_region
      %78 = dma.done [#allocation9], 256
    $region33: #{tpu_custom_call.1} parent=1 // pred_fallthru
      _
    %v80 = vld [vmem:[#allocation2] sm:$0xff]
    %v81 = vld [vmem:[#allocation2 + $0x8] sm:$0xff]
    %v82 = vld [vmem:[#allocation5] sm:$0x1]
    %v83 = vld [vmem:[#allocation7] sm:$0xf]
    %v84 = vld [vmem:[#allocation7 + $0x4] sm:$0xf]
    %v85 = vld [vmem:[#allocation7 + $0x8] sm:$0xf]
    %v86 = vld [vmem:[#allocation7 + $0xc] sm:$0xf]
    %v87 = vld [vmem:[#allocation8] sm:$0xf]
    %v88 = vld [vmem:[#allocation8 + $0x4] sm:$0xf]
    %v89 = vld [vmem:[#allocation8 + $0x8] sm:$0xf]
    %v90 = vld [vmem:[#allocation8 + $0xc] sm:$0xf]
    %v91 = vmul.f32 %v80, %v80
    %v92 = vmul.f32 %v81, %v81
    %vm93 = vcmask 261120
    %v94 = vsel %vm93, %v91, 0.0
    %95 = vadd.xlane.f32.xlu0 %v94
    %v96 = vpop.xlane.xlu0 %95
    %v97 = vsel %vm93, %v92, 0.0
    %98 = vadd.xlane.f32.xlu0 %v97
    %v99 = vpop.xlane.xlu0 %98
    %v100 = vrcp.pop 32.0
    %v101 = vmul.f32 32.0, %v100
    %v102 = vsub.f32 1.0, %v101
    %v103 = vmul.f32 %v100, %v102
    %v104 = vadd.f32 %v100, %v103
    %vm105 = vweird.f32 %v100
    %v106 = vsel %vm105, %v100, %v104
    %v107 = vmul.f32 %v96, %v106
    %v108 = vmul.f32 %v99, %v106
    %v109 = vadd.f32 %v107, 1e-06
    %v110 = vadd.f32 %v108, 1e-06
    %v111 = vrsqrt.pop %v109
    %v112 = vmul.f32 %v111, %v109
    %v113 = vmul.f32 %v112, %v111
    %v114 = vmul.f32 0.5, %v113
    %v115 = vsub.f32 1.5, %v114
    %v116 = vmul.f32 %v111, %v115
    %vm117 = vweird.f32 %v109
    %vm118 = vweird.f32 %v111
    %vm119 = vmor %vm117, %vm118
    %v120 = vsel %vm119, %v111, %v116
    %v121 = vrsqrt.pop %v110
    %v122 = vmul.f32 %v121, %v110
    %v123 = vmul.f32 %v122, %v121
    %v124 = vmul.f32 0.5, %v123
    %v125 = vsub.f32 1.5, %v124
    %v126 = vmul.f32 %v121, %v125
    %vm127 = vweird.f32 %v110
    %vm128 = vweird.f32 %v121
    %vm129 = vmor %vm127, %vm128
    %v130 = vsel %vm129, %v121, %v126
    %v131 = vmul.f32 %v80, %v120
    %v132 = vmul.f32 %v81, %v130
    %v134 = vperm.slane %v82, 0
    %v136 = vmul.f32 %v131, %v134
    %v137 = vmul.f32 %v132, %v134
    %v138 = vpack.c.bf16 %v137, %v136
    %v143 = vunpack.c.l.b16 %v83
    %v144 = vunpack.c.l.b16 %v84
    %v145 = vunpack.c.l.b16 %v85
    %v146 = vunpack.c.l.b16 %v86
    %v147 = vpack.c.b16 %v144, %v143
    %v148 = vpack.c.b16 %v146, %v145
    %v152 = vsel %vm93, %v138, 0
    %154 = vmatpush.bf16.msra.mxu0 0
    %155 = vmatpush.bf16.msra.mxu0 0
    %156 = vmatpush.bf16.msra.mxu0 0
    %157 = vmatpush.bf16.msra.mxu0 0
    %158 = vmatpush.bf16.msra.mxu0 0
    %159 = vmatpush.bf16.msra.mxu0 0
    %160 = vmatpush.bf16.msra.mxu0 %v148
    %161 = vmatpush.bf16.msra.mxu0 %v147
    %162 = vmatmul.bf16.gmra.mxu0 %v152
    %v163 = vpop.f32.mrf.mxu0
    %v164 = vadd.f32 0.0, %v163
    %v165 = vpop.f32.mrf.mxu0
    %v166 = vadd.f32 0.0, %v165
    %167 = vdwg.mxu0
    %v168 = vpack.c.bf16 %v164, %v164
    %170 = vrot.lane.b32.xlu0 %v168, 96
    %v171 = vpop.permute.xlu0 %170
    %vm172 = vcmask 64512
    %v174 = vsel %vm172, %v168, 0
    %v177 = vsel %vm172, %v171, 0
    %179 = vmatpush.bf16.xpose.msra.mxu0 0
    %180 = vmatpush.bf16.xpose.msra.mxu0 0
    %181 = vmatpush.bf16.xpose.msra.mxu0 0
    %182 = vmatpush.bf16.xpose.msra.mxu0 0
    %183 = vmatpush.bf16.xpose.msra.mxu0 0
    %184 = vmatpush.bf16.xpose.msra.mxu0 0
    %185 = vmatpush.bf16.xpose.msra.mxu0 0
    %186 = vmatpush.bf16.xpose.msra.mxu0 %v177
    %187 = vmatmul.bf16.gmra.mxu0 %v174
    %v188 = vpop.f32.mrf.mxu0
    %v189 = vadd.f32 0.0, %v188
    %v190 = vpop.f32.mrf.mxu0
    %191 = vdwg.mxu0
    %v192 = vsel %vm172, %v189, -inf
    %193 = vmax.xlane.f32.xlu0 %v192
    %v194 = vpop.xlane.xlu0 %193
    %v195 = vsub.f32 %v189, %v194
    %v196 = vmul.f32 %v195, 1.442695
    %v197 = vpow.pop %v196
    %v198 = vsel %vm172, %v197, 0.0
    %199 = vadd.xlane.f32.xlu0 %v198
    %v200 = vpop.xlane.xlu0 %199
    %v201 = vrcp.pop %v200
    %v202 = vmul.f32 %v197, %v201
    %v203 = vpack.c.bf16 %v202, %v202
    %204 = vrot.lane.b32.xlu0 %v168, 64
    %v205 = vpop.permute.xlu0 %204
    %v207 = vsel %vm172, %v203, 0
    %vm209 = vcmask 1043456
    %v211 = vsel %vm209, %v205, 0
    %213 = vmatpush.bf16.msra.mxu0 0
    %214 = vmatpush.bf16.msra.mxu0 0
    %215 = vmatpush.bf16.msra.mxu0 0
    %216 = vmatpush.bf16.msra.mxu0 0
    %217 = vmatpush.bf16.msra.mxu0 0
    %218 = vmatpush.bf16.msra.mxu0 0
    %219 = vmatpush.bf16.msra.mxu0 0
    %220 = vmatpush.bf16.msra.mxu0 %v211
    %221 = vmatmul.bf16.gmra.mxu0 %v207
    %v222 = vpop.f32.mrf.mxu0
    %v223 = vadd.f32 0.0, %v222
    %v224 = vpop.f32.mrf.mxu0
    %225 = vdwg.mxu0
    %v226 = vpack.c.bf16 %v223, %v223
    %227 = vrot.lane.b32.xlu0 %v168, 120
    %v228 = vpop.permute.xlu0 %227
    %229 = vrot.lane.b32.xlu0 %v168, 88
    %v230 = vpop.permute.xlu0 %229
    %v232 = vsel %vm172, %v228, 0
    %v235 = vsel %vm172, %v230, 0
    %237 = vmatpush.bf16.xpose.msra.mxu0 0
    %238 = vmatpush.bf16.xpose.msra.mxu0 0
    %239 = vmatpush.bf16.xpose.msra.mxu0 0
    %240 = vmatpush.bf16.xpose.msra.mxu0 0
    %241 = vmatpush.bf16.xpose.msra.mxu0 0
    %242 = vmatpush.bf16.xpose.msra.mxu0 0
    %243 = vmatpush.bf16.xpose.msra.mxu0 0
    %244 = vmatpush.bf16.xpose.msra.mxu0 %v235
    %245 = vmatmul.bf16.gmra.mxu0 %v232
    %v246 = vpop.f32.mrf.mxu0
    %v247 = vadd.f32 0.0, %v246
    %v248 = vpop.f32.mrf.mxu0
    %249 = vdwg.mxu0
    %v250 = vsel %vm172, %v247, -inf
    %251 = vmax.xlane.f32.xlu0 %v250
    %v252 = vpop.xlane.xlu0 %251
    %v253 = vsub.f32 %v247, %v252
    %v254 = vmul.f32 %v253, 1.442695
    %v255 = vpow.pop %v254
    %v256 = vsel %vm172, %v255, 0.0
    %257 = vadd.xlane.f32.xlu0 %v256
    %v258 = vpop.xlane.xlu0 %257
    %v259 = vrcp.pop %v258
    %v260 = vmul.f32 %v255, %v259
    %v261 = vpack.c.bf16 %v260, %v260
    %262 = vrot.lane.b32.xlu0 %v168, 56
    %v263 = vpop.permute.xlu0 %262
    %v265 = vsel %vm172, %v261, 0
    %v268 = vsel %vm209, %v263, 0
    %270 = vmatpush.bf16.msra.mxu0 0
    %271 = vmatpush.bf16.msra.mxu0 0
    %272 = vmatpush.bf16.msra.mxu0 0
    %273 = vmatpush.bf16.msra.mxu0 0
    %274 = vmatpush.bf16.msra.mxu0 0
    %275 = vmatpush.bf16.msra.mxu0 0
    %276 = vmatpush.bf16.msra.mxu0 0
    %277 = vmatpush.bf16.msra.mxu0 %v268
    %278 = vmatmul.bf16.gmra.mxu0 %v265
    %v279 = vpop.f32.mrf.mxu0
    %v280 = vadd.f32 0.0, %v279
    %v281 = vpop.f32.mrf.mxu0
    %282 = vdwg.mxu0
    %v283 = vpack.c.bf16 %v280, %v280
    %284 = vrot.lane.b32.xlu0 %v168, 112
    %v285 = vpop.permute.xlu0 %284
    %286 = vrot.lane.b32.xlu0 %v168, 80
    %v287 = vpop.permute.xlu0 %286
    %v289 = vsel %vm172, %v285, 0
    %v292 = vsel %vm172, %v287, 0
    %294 = vmatpush.bf16.xpose.msra.mxu0 0
    %295 = vmatpush.bf16.xpose.msra.mxu0 0
    %296 = vmatpush.bf16.xpose.msra.mxu0 0
    %297 = vmatpush.bf16.xpose.msra.mxu0 0
    %298 = vmatpush.bf16.xpose.msra.mxu0 0
    %299 = vmatpush.bf16.xpose.msra.mxu0 0
    %300 = vmatpush.bf16.xpose.msra.mxu0 0
    %301 = vmatpush.bf16.xpose.msra.mxu0 %v292
    %302 = vmatmul.bf16.gmra.mxu0 %v289
    %v303 = vpop.f32.mrf.mxu0
    %v304 = vadd.f32 0.0, %v303
    %v305 = vpop.f32.mrf.mxu0
    %306 = vdwg.mxu0
    %v307 = vsel %vm172, %v304, -inf
    %308 = vmax.xlane.f32.xlu0 %v307
    %v309 = vpop.xlane.xlu0 %308
    %v310 = vsub.f32 %v304, %v309
    %v311 = vmul.f32 %v310, 1.442695
    %v312 = vpow.pop %v311
    %v313 = vsel %vm172, %v312, 0.0
    %314 = vadd.xlane.f32.xlu0 %v313
    %v315 = vpop.xlane.xlu0 %314
    %v316 = vrcp.pop %v315
    %v317 = vmul.f32 %v312, %v316
    %v318 = vpack.c.bf16 %v317, %v317
    %319 = vrot.lane.b32.xlu0 %v168, 48
    %v320 = vpop.permute.xlu0 %319
    %v322 = vsel %vm172, %v318, 0
    %v325 = vsel %vm209, %v320, 0
    %327 = vmatpush.bf16.msra.mxu0 0
    %328 = vmatpush.bf16.msra.mxu0 0
    %329 = vmatpush.bf16.msra.mxu0 0
    %330 = vmatpush.bf16.msra.mxu0 0
    %331 = vmatpush.bf16.msra.mxu0 0
    %332 = vmatpush.bf16.msra.mxu0 0
    %333 = vmatpush.bf16.msra.mxu0 0
    %334 = vmatpush.bf16.msra.mxu0 %v325
    %335 = vmatmul.bf16.gmra.mxu0 %v322
    %v336 = vpop.f32.mrf.mxu0
    %v337 = vadd.f32 0.0, %v336
    %v338 = vpop.f32.mrf.mxu0
    %339 = vdwg.mxu0
    %v340 = vpack.c.bf16 %v337, %v337
    %341 = vrot.lane.b32.xlu0 %v168, 104
    %v342 = vpop.permute.xlu0 %341
    %343 = vrot.lane.b32.xlu0 %v168, 72
    %v344 = vpop.permute.xlu0 %343
    %v346 = vsel %vm172, %v342, 0
    %v349 = vsel %vm172, %v344, 0
    %351 = vmatpush.bf16.xpose.msra.mxu0 0
    %352 = vmatpush.bf16.xpose.msra.mxu0 0
    %353 = vmatpush.bf16.xpose.msra.mxu0 0
    %354 = vmatpush.bf16.xpose.msra.mxu0 0
    %355 = vmatpush.bf16.xpose.msra.mxu0 0
    %356 = vmatpush.bf16.xpose.msra.mxu0 0
    %357 = vmatpush.bf16.xpose.msra.mxu0 0
    %358 = vmatpush.bf16.xpose.msra.mxu0 %v349
    %359 = vmatmul.bf16.gmra.mxu0 %v346
    %v360 = vpop.f32.mrf.mxu0
    %v361 = vadd.f32 0.0, %v360
    %v362 = vpop.f32.mrf.mxu0
    %363 = vdwg.mxu0
    %v364 = vsel %vm172, %v361, -inf
    %365 = vmax.xlane.f32.xlu0 %v364
    %v366 = vpop.xlane.xlu0 %365
    %v367 = vsub.f32 %v361, %v366
    %v368 = vmul.f32 %v367, 1.442695
    %v369 = vpow.pop %v368
    %v370 = vsel %vm172, %v369, 0.0
    %371 = vadd.xlane.f32.xlu0 %v370
    %v372 = vpop.xlane.xlu0 %371
    %v373 = vrcp.pop %v372
    %v374 = vmul.f32 %v369, %v373
    %v375 = vpack.c.bf16 %v374, %v374
    %376 = vrot.lane.b32.xlu0 %v168, 40
    %v377 = vpop.permute.xlu0 %376
    %v379 = vsel %vm172, %v375, 0
    %v382 = vsel %vm209, %v377, 0
    %384 = vmatpush.bf16.msra.mxu0 0
    %385 = vmatpush.bf16.msra.mxu0 0
    %386 = vmatpush.bf16.msra.mxu0 0
    %387 = vmatpush.bf16.msra.mxu0 0
    %388 = vmatpush.bf16.msra.mxu0 0
    %389 = vmatpush.bf16.msra.mxu0 0
    %390 = vmatpush.bf16.msra.mxu0 0
    %391 = vmatpush.bf16.msra.mxu0 %v382
    %392 = vmatmul.bf16.gmra.mxu0 %v379
    %v393 = vpop.f32.mrf.mxu0
    %v394 = vadd.f32 0.0, %v393
    %v395 = vpop.f32.mrf.mxu0
    %396 = vdwg.mxu0
    %v397 = vpack.c.bf16 %v394, %v394
    %v399 = vunpack.c.l.b16 %v283
    %v400 = vpack.c.b16 %v399, %v399
    %401 = vrot.lane.b32.xlu0 %v400, 8
    %v402 = vpop.permute.xlu0 %401
    %v404 = vunpack.c.l.b16 %v340
    %v405 = vpack.c.b16 %v404, %v404
    %406 = vrot.lane.b32.xlu0 %v405, 16
    %v407 = vpop.permute.xlu0 %406
    %v409 = vunpack.c.l.b16 %v397
    %v410 = vpack.c.b16 %v409, %v409
    %411 = vrot.lane.b32.xlu0 %v410, 24
    %v412 = vpop.permute.xlu0 %411
    %v415 = vsel %vm172, %v226, %v402
    %vm416 = vcmask 130048
    %v418 = vsel %vm416, %v415, %v407
    %vm419 = vcmask 195584
    %v421 = vsel %vm419, %v418, %v412
    %v422 = vpack.c.bf16 %v166, %v166
    %424 = vrot.lane.b32.xlu0 %v422, 96
    %v425 = vpop.permute.xlu0 %424
    %v427 = vsel %vm172, %v422, 0
    %v430 = vsel %vm172, %v425, 0
    %432 = vmatpush.bf16.xpose.msra.mxu0 0
    %433 = vmatpush.bf16.xpose.msra.mxu0 0
    %434 = vmatpush.bf16.xpose.msra.mxu0 0
    %435 = vmatpush.bf16.xpose.msra.mxu0 0
    %436 = vmatpush.bf16.xpose.msra.mxu0 0
    %437 = vmatpush.bf16.xpose.msra.mxu0 0
    %438 = vmatpush.bf16.xpose.msra.mxu0 0
    %439 = vmatpush.bf16.xpose.msra.mxu0 %v430
    %440 = vmatmul.bf16.gmra.mxu0 %v427
    %v441 = vpop.f32.mrf.mxu0
    %v442 = vadd.f32 0.0, %v441
    %v443 = vpop.f32.mrf.mxu0
    %444 = vdwg.mxu0
    %v445 = vsel %vm172, %v442, -inf
    %446 = vmax.xlane.f32.xlu0 %v445
    %v447 = vpop.xlane.xlu0 %446
    %v448 = vsub.f32 %v442, %v447
    %v449 = vmul.f32 %v448, 1.442695
    %v450 = vpow.pop %v449
    %v451 = vsel %vm172, %v450, 0.0
    %452 = vadd.xlane.f32.xlu0 %v451
    %v453 = vpop.xlane.xlu0 %452
    %v454 = vrcp.pop %v453
    %v455 = vmul.f32 %v450, %v454
    %v456 = vpack.c.bf16 %v455, %v455
    %457 = vrot.lane.b32.xlu0 %v422, 64
    %v458 = vpop.permute.xlu0 %457
    %v460 = vsel %vm172, %v456, 0
    %v463 = vsel %vm209, %v458, 0
    %465 = vmatpush.bf16.msra.mxu0 0
    %466 = vmatpush.bf16.msra.mxu0 0
    %467 = vmatpush.bf16.msra.mxu0 0
    %468 = vmatpush.bf16.msra.mxu0 0
    %469 = vmatpush.bf16.msra.mxu0 0
    %470 = vmatpush.bf16.msra.mxu0 0
    %471 = vmatpush.bf16.msra.mxu0 0
    %472 = vmatpush.bf16.msra.mxu0 %v463
    %473 = vmatmul.bf16.gmra.mxu0 %v460
    %v474 = vpop.f32.mrf.mxu0
    %v475 = vadd.f32 0.0, %v474
    %v476 = vpop.f32.mrf.mxu0
    %477 = vdwg.mxu0
    %v478 = vpack.c.bf16 %v475, %v475
    %479 = vrot.lane.b32.xlu0 %v422, 120
    %v480 = vpop.permute.xlu0 %479
    %481 = vrot.lane.b32.xlu0 %v422, 88
    %v482 = vpop.permute.xlu0 %481
    %v484 = vsel %vm172, %v480, 0
    %v487 = vsel %vm172, %v482, 0
    %489 = vmatpush.bf16.xpose.msra.mxu0 0
    %490 = vmatpush.bf16.xpose.msra.mxu0 0
    %491 = vmatpush.bf16.xpose.msra.mxu0 0
    %492 = vmatpush.bf16.xpose.msra.mxu0 0
    %493 = vmatpush.bf16.xpose.msra.mxu0 0
    %494 = vmatpush.bf16.xpose.msra.mxu0 0
    %495 = vmatpush.bf16.xpose.msra.mxu0 0
    %496 = vmatpush.bf16.xpose.msra.mxu0 %v487
    %497 = vmatmul.bf16.gmra.mxu0 %v484
    %v498 = vpop.f32.mrf.mxu0
    %v499 = vadd.f32 0.0, %v498
    %v500 = vpop.f32.mrf.mxu0
    %501 = vdwg.mxu0
    %v502 = vsel %vm172, %v499, -inf
    %503 = vmax.xlane.f32.xlu0 %v502
    %v504 = vpop.xlane.xlu0 %503
    %v505 = vsub.f32 %v499, %v504
    %v506 = vmul.f32 %v505, 1.442695
    %v507 = vpow.pop %v506
    %v508 = vsel %vm172, %v507, 0.0
    %509 = vadd.xlane.f32.xlu0 %v508
    %v510 = vpop.xlane.xlu0 %509
    %v511 = vrcp.pop %v510
    %v512 = vmul.f32 %v507, %v511
    %v513 = vpack.c.bf16 %v512, %v512
    %514 = vrot.lane.b32.xlu0 %v422, 56
    %v515 = vpop.permute.xlu0 %514
    %v517 = vsel %vm172, %v513, 0
    %v520 = vsel %vm209, %v515, 0
    %522 = vmatpush.bf16.msra.mxu0 0
    %523 = vmatpush.bf16.msra.mxu0 0
    %524 = vmatpush.bf16.msra.mxu0 0
    %525 = vmatpush.bf16.msra.mxu0 0
    %526 = vmatpush.bf16.msra.mxu0 0
    %527 = vmatpush.bf16.msra.mxu0 0
    %528 = vmatpush.bf16.msra.mxu0 0
    %529 = vmatpush.bf16.msra.mxu0 %v520
    %530 = vmatmul.bf16.gmra.mxu0 %v517
    %v531 = vpop.f32.mrf.mxu0
    %v532 = vadd.f32 0.0, %v531
    %v533 = vpop.f32.mrf.mxu0
    %534 = vdwg.mxu0
    %v535 = vpack.c.bf16 %v532, %v532
    %536 = vrot.lane.b32.xlu0 %v422, 112
    %v537 = vpop.permute.xlu0 %536
    %538 = vrot.lane.b32.xlu0 %v422, 80
    %v539 = vpop.permute.xlu0 %538
    %v541 = vsel %vm172, %v537, 0
    %v544 = vsel %vm172, %v539, 0
    %546 = vmatpush.bf16.xpose.msra.mxu0 0
    %547 = vmatpush.bf16.xpose.msra.mxu0 0
    %548 = vmatpush.bf16.xpose.msra.mxu0 0
    %549 = vmatpush.bf16.xpose.msra.mxu0 0
    %550 = vmatpush.bf16.xpose.msra.mxu0 0
    %551 = vmatpush.bf16.xpose.msra.mxu0 0
    %552 = vmatpush.bf16.xpose.msra.mxu0 0
    %553 = vmatpush.bf16.xpose.msra.mxu0 %v544
    %554 = vmatmul.bf16.gmra.mxu0 %v541
    %v555 = vpop.f32.mrf.mxu0
    %v556 = vadd.f32 0.0, %v555
    %v557 = vpop.f32.mrf.mxu0
    %558 = vdwg.mxu0
    %v559 = vsel %vm172, %v556, -inf
    %560 = vmax.xlane.f32.xlu0 %v559
    %v561 = vpop.xlane.xlu0 %560
    %v562 = vsub.f32 %v556, %v561
    %v563 = vmul.f32 %v562, 1.442695
    %v564 = vpow.pop %v563
    %v565 = vsel %vm172, %v564, 0.0
    %566 = vadd.xlane.f32.xlu0 %v565
    %v567 = vpop.xlane.xlu0 %566
    %v568 = vrcp.pop %v567
    %v569 = vmul.f32 %v564, %v568
    %v570 = vpack.c.bf16 %v569, %v569
    %571 = vrot.lane.b32.xlu0 %v422, 48
    %v572 = vpop.permute.xlu0 %571
    %v574 = vsel %vm172, %v570, 0
    %v577 = vsel %vm209, %v572, 0
    %579 = vmatpush.bf16.msra.mxu0 0
    %580 = vmatpush.bf16.msra.mxu0 0
    %581 = vmatpush.bf16.msra.mxu0 0
    %582 = vmatpush.bf16.msra.mxu0 0
    %583 = vmatpush.bf16.msra.mxu0 0
    %584 = vmatpush.bf16.msra.mxu0 0
    %585 = vmatpush.bf16.msra.mxu0 0
    %586 = vmatpush.bf16.msra.mxu0 %v577
    %587 = vmatmul.bf16.gmra.mxu0 %v574
    %v588 = vpop.f32.mrf.mxu0
    %v589 = vadd.f32 0.0, %v588
    %v590 = vpop.f32.mrf.mxu0
    %591 = vdwg.mxu0
    %v592 = vpack.c.bf16 %v589, %v589
    %593 = vrot.lane.b32.xlu0 %v422, 104
    %v594 = vpop.permute.xlu0 %593
    %595 = vrot.lane.b32.xlu0 %v422, 72
    %v596 = vpop.permute.xlu0 %595
    %v598 = vsel %vm172, %v594, 0
    %v601 = vsel %vm172, %v596, 0
    %603 = vmatpush.bf16.xpose.msra.mxu0 0
    %604 = vmatpush.bf16.xpose.msra.mxu0 0
    %605 = vmatpush.bf16.xpose.msra.mxu0 0
    %606 = vmatpush.bf16.xpose.msra.mxu0 0
    %607 = vmatpush.bf16.xpose.msra.mxu0 0
    %608 = vmatpush.bf16.xpose.msra.mxu0 0
    %609 = vmatpush.bf16.xpose.msra.mxu0 0
    %610 = vmatpush.bf16.xpose.msra.mxu0 %v601
    %611 = vmatmul.bf16.gmra.mxu0 %v598
    %v612 = vpop.f32.mrf.mxu0
    %v613 = vadd.f32 0.0, %v612
    %v614 = vpop.f32.mrf.mxu0
    %615 = vdwg.mxu0
    %v616 = vsel %vm172, %v613, -inf
    %617 = vmax.xlane.f32.xlu0 %v616
    %v618 = vpop.xlane.xlu0 %617
    %v619 = vsub.f32 %v613, %v618
    %v620 = vmul.f32 %v619, 1.442695
    %v621 = vpow.pop %v620
    %v622 = vsel %vm172, %v621, 0.0
    %623 = vadd.xlane.f32.xlu0 %v622
    %v624 = vpop.xlane.xlu0 %623
    %v625 = vrcp.pop %v624
    %v626 = vmul.f32 %v621, %v625
    %v627 = vpack.c.bf16 %v626, %v626
    %628 = vrot.lane.b32.xlu0 %v422, 40
    %v629 = vpop.permute.xlu0 %628
    %v631 = vsel %vm172, %v627, 0
    %v634 = vsel %vm209, %v629, 0
    %636 = vmatpush.bf16.msra.mxu0 0
    %637 = vmatpush.bf16.msra.mxu0 0
    %638 = vmatpush.bf16.msra.mxu0 0
    %639 = vmatpush.bf16.msra.mxu0 0
    %640 = vmatpush.bf16.msra.mxu0 0
    %641 = vmatpush.bf16.msra.mxu0 0
    %642 = vmatpush.bf16.msra.mxu0 0
    %643 = vmatpush.bf16.msra.mxu0 %v634
    %644 = vmatmul.bf16.gmra.mxu0 %v631
    %v645 = vpop.f32.mrf.mxu0
    %v646 = vadd.f32 0.0, %v645
    %v647 = vpop.f32.mrf.mxu0
    %648 = vdwg.mxu0
    %v649 = vpack.c.bf16 %v646, %v646
    %v651 = vunpack.c.l.b16 %v535
    %v652 = vpack.c.b16 %v651, %v651
    %653 = vrot.lane.b32.xlu0 %v652, 8
    %v654 = vpop.permute.xlu0 %653
    %v656 = vunpack.c.l.b16 %v592
    %v657 = vpack.c.b16 %v656, %v656
    %658 = vrot.lane.b32.xlu0 %v657, 16
    %v659 = vpop.permute.xlu0 %658
    %v661 = vunpack.c.l.b16 %v649
    %v662 = vpack.c.b16 %v661, %v661
    %663 = vrot.lane.b32.xlu0 %v662, 24
    %v664 = vpop.permute.xlu0 %663
    %v667 = vsel %vm172, %v478, %v654
    %v669 = vsel %vm416, %v667, %v659
    %v671 = vsel %vm419, %v669, %v664
    %v673 = vrot.slane %v671, 4
    %v675 = vsel %vm209, %v421, %v673
    %v680 = vunpack.c.l.b16 %v87
    %v681 = vunpack.c.l.b16 %v88
    %v682 = vunpack.c.l.b16 %v89
    %v683 = vunpack.c.l.b16 %v90
    %v684 = vpack.c.b16 %v681, %v680
    %v685 = vpack.c.b16 %v683, %v682
    %v688 = vsel %vm93, %v675, 0
    %690 = vmatpush.bf16.msra.mxu0 0
    %691 = vmatpush.bf16.msra.mxu0 0
    %692 = vmatpush.bf16.msra.mxu0 0
    %693 = vmatpush.bf16.msra.mxu0 0
    %694 = vmatpush.bf16.msra.mxu0 0
    %695 = vmatpush.bf16.msra.mxu0 0
    %696 = vmatpush.bf16.msra.mxu0 %v685
    %697 = vmatpush.bf16.msra.mxu0 %v684
    %698 = vmatmul.bf16.gmra.mxu0 %v688
    %v699 = vpop.f32.mrf.mxu0
    %v700 = vadd.f32 0.0, %v699
    %v701 = vpop.f32.mrf.mxu0
    %v702 = vadd.f32 0.0, %v701
    %703 = vdwg.mxu0
    %v704 = vadd.f32 %v80, %v700
    %v705 = vadd.f32 %v81, %v702
    %706 = vst.msk [vmem:[#allocation10] sm:$0xff] %vm93, %v704
    %707 = vst.msk [vmem:[#allocation10 + $0x8] sm:$0xff] %vm93, %v705
    // Predicated region
    $region34: #{tpu_custom_call.1} parent=1 // pred_check
      _
    $region35: #{tpu_custom_call.1} parent=1 // pred_check_branch
      %709 = sbr.rel (0) target = $region37
    $region36: #{tpu_custom_call.1} parent=1 // pred_region
      %711 = vsyncadd [#allocation4], 0
      %s712 = sshll.u32 [#allocation10], 4
      %s713 = int_to_ptr.vmem [resolvable:$true] %s712
      %s714 = sshll.u32 %s4, 4
      %s715 = int_to_ptr.hbm [resolvable:$true] %s714
      %720 = dma.vmem_to_hbm [thread:$0]  %s713, 256, %s715, [#allocation4], 128, 128, 8
    $region37: #{tpu_custom_call.1} parent=1 // pred_fallthru
      _
    // Predicated region
    $region38: #{tpu_custom_call.1} parent=1 // pred_check
      _
    $region39: #{tpu_custom_call.1} parent=1 // pred_check_branch
      %722 = sbr.rel (0) target = $region41
    $region40: #{tpu_custom_call.1} parent=1 // pred_region
      %724 = dma.done [#allocation4], 256
    $region41: #{tpu_custom_call.1} parent=1 // pred_fallthru
      _
    %725 = vsyncpa [#allocation3], 1
    %726 = vsyncpa [#allocation6], 1
    %727 = vsyncpa [#allocation9], 1
    %728 = vsyncpa [#allocation4], 1

</llo_original>
